<compile_context>
chip_gen: v6e
topology: v6e:2x2x1
jax: 0.10.0
libtpu: 0.0.40
codegen_flags: <defaults>
</compile_context>

<pallas_src>
import functools

import jax
import jax.numpy as jnp
from jax.experimental import pallas as pl
from jax.experimental.pallas import tpu as pltpu


def _round_up(x, m):
    return (x + m - 1) // m * m


def fcblock_kernel(x_ref, w_ref, gamma_ref, beta_ref, rnd_ref, o_ref, acc_ref,
                   *, p, eps):
    k = pl.program_id(1)  # F (reduction) axis, last in grid

    @pl.when(k == 0)
    def _init():
        acc_ref[...] = jnp.zeros_like(acc_ref)

    # ---- Linear (no bias): partial (B,tF) @ (tF,tH) accumulated in f32 ----
    acc_ref[...] += jnp.dot(x_ref[...], w_ref[...],
                            preferred_element_type=jnp.float32)

    # ---- Epilogue only once per output tile, at the last K step ----
    @pl.when(k == pl.num_programs(1) - 1)
    def _epilogue():
        y = acc_ref[...]                                      # (B, tH) f32

        # BatchNorm1d (training mode: batch mean, biased variance).
        mean = jnp.mean(y, axis=0, keepdims=True)             # (1, tH)
        diff = y - mean
        var = jnp.mean(diff * diff, axis=0, keepdims=True)
        x_hat = diff * jax.lax.rsqrt(var + eps)
        out = gamma_ref[...] * x_hat + beta_ref[...]

        # ReLU
        out = jnp.maximum(out, 0.0)

        # Dropout(p): keep w.p. (1-p), scale survivors by 1/(1-p).
        if p > 0.0:
            scale = (1.0 / (1.0 - p)) if p < 1.0 else 0.0
            keep = rnd_ref[...] >= jnp.float32(p)
            out = jnp.where(keep, out * jnp.float32(scale), 0.0)

        o_ref[...] = out.astype(o_ref.dtype)


def fc_block_forward(x, weight_t, gamma, beta, dropout_uniforms, *,
                     p, eps=1e-5, block_h=256, block_f=512):
    """Fused FCBlock forward.

    x:                (B, F)   activations
    weight_t:         (F, H)   Linear weight, pre-transposed (W^T)
    gamma, beta:      (1, H)   BatchNorm affine params
    dropout_uniforms: (B, H)   U[0,1) randoms for the dropout mask
    """
    B, F = x.shape
    Fw, H = weight_t.shape
    assert Fw == F

    # Lane-dense, 128-aligned tiles; full batch per tile (BN stats stay local).
    tH = min(block_h, _round_up(H, 128))
    H_pad = _round_up(H, tH)
    tF = min(block_f, _round_up(F, 128))
    F_pad = _round_up(F, tF)

    x_p = jnp.pad(x, ((0, 0), (0, F_pad - F)))
    w_p = jnp.pad(weight_t, ((0, F_pad - F), (0, H_pad - H)))
    gamma_p = jnp.pad(gamma.reshape(1, H), ((0, 0), (0, H_pad - H)))
    beta_p = jnp.pad(beta.reshape(1, H), ((0, 0), (0, H_pad - H)))
    rnd_p = jnp.pad(dropout_uniforms, ((0, 0), (0, H_pad - H)),
                    constant_values=1.0)

    grid = (H_pad // tH, F_pad // tF)   # (parallel H tiles, reduction F tiles)
    kernel = functools.partial(fcblock_kernel, p=float(p), eps=float(eps))

    out_p = pl.pallas_call(
        kernel,
        out_shape=jax.ShapeDtypeStruct((B, H_pad), x.dtype),
        grid_spec=pltpu.PrefetchScalarGridSpec(
            num_scalar_prefetch=0,
            grid=grid,
            in_specs=[
                pl.BlockSpec((B, tF), lambda j, k: (0, k)),    # x
                pl.BlockSpec((tF, tH), lambda j, k: (k, j)),   # W^T
                pl.BlockSpec((1, tH), lambda j, k: (0, j)),    # gamma
                pl.BlockSpec((1, tH), lambda j, k: (0, j)),    # beta
                pl.BlockSpec((B, tH), lambda j, k: (0, j)),    # dropout uniforms
            ],
            out_specs=pl.BlockSpec((B, tH), lambda j, k: (0, j)),
            scratch_shapes=[pltpu.VMEM((B, tH), jnp.float32)],
        ),
        compiler_params=pltpu.CompilerParams(
            dimension_semantics=("parallel", "arbitrary"),
        ),
    )(x_p, w_p, gamma_p, beta_p, rnd_p)

    return out_p[:, :H]


if __name__ == "__main__":
    # Small shapes consistent with the module: batch=8, in_features=32, hidden=64
    B, F, H = 8, 32, 64
    p = 0.1
    eps = 1e-5

    key = jax.random.PRNGKey(0)
    kx, kw, kg, kb, kd = jax.random.split(key, 5)

    x = jax.random.normal(kx, (B, F), dtype=jnp.float32)
    # nn.Linear weight has shape (H, F); store it pre-transposed as (F, H).
    weight = jax.random.normal(kw, (H, F), dtype=jnp.float32) * (1.0 / jnp.sqrt(F))
    weight_t = weight.T
    # BatchNorm affine params (PyTorch inits gamma=1, beta=0; perturb deterministically).
    gamma = 1.0 + 0.1 * jax.random.normal(kg, (1, H), dtype=jnp.float32)
    beta = 0.1 * jax.random.normal(kb, (1, H), dtype=jnp.float32)
    # Dropout uniforms generated host-side (same mask fed to kernel and reference).
    rnd = jax.random.uniform(kd, (B, H), dtype=jnp.float32)

    out = fc_block_forward(x, weight_t, gamma, beta, rnd, p=p, eps=eps)
    jax.block_until_ready(out)

    # Pure-JAX reference with the same dropout mask.
    y = x @ weight_t
    mean = jnp.mean(y, axis=0, keepdims=True)
    var = jnp.mean((y - mean) ** 2, axis=0, keepdims=True)
    ref = gamma * (y - mean) * jax.lax.rsqrt(var + eps) + beta
    ref = jnp.maximum(ref, 0.0)
    ref = jnp.where(rnd >= p, ref / (1.0 - p), 0.0)

    assert out.shape == (B, H)
    assert out.dtype == jnp.float32
    assert float(jnp.max(jnp.abs(out - ref))) < 1e-2
    print("KERNEL_OK")
</pallas_src>

<mosaic_0001>
module attributes {stable_mosaic.version = 11 : i64} {
  func.func @fcblock_kernel(%arg0: i32, %arg1: i32, %arg2: memref<8x128xf32, #tpu.memory_space<vmem>>, %arg3: memref<128x128xf32, #tpu.memory_space<vmem>>, %arg4: memref<1x128xf32, #tpu.memory_space<vmem>>, %arg5: memref<1x128xf32, #tpu.memory_space<vmem>>, %arg6: memref<8x128xf32, #tpu.memory_space<vmem>>, %arg7: memref<8x128xf32, #tpu.memory_space<vmem>>, %arg8: memref<8x128xf32, #tpu.memory_space<vmem>>) attributes {dimension_semantics = [#tpu.dimension_semantics<parallel>, #tpu.dimension_semantics<arbitrary>], iteration_bounds = array<i64: 1, 1>, scalar_prefetch = 0 : i64, scratch_operands = 1 : i64, tpu.core_type = #tpu.core_type<tc>, window_params = [{transform_indices = @transform_0, window_bounds = array<i64: 8, 128>}, {transform_indices = @transform_1, window_bounds = array<i64: 128, 128>}, {transform_indices = @transform_2, window_bounds = array<i64: 1, 128>}, {transform_indices = @transform_3, window_bounds = array<i64: 1, 128>}, {transform_indices = @transform_4, window_bounds = array<i64: 8, 128>}, {transform_indices = @transform_5, window_bounds = array<i64: 8, 128>}]} {
    %c0_i32 = arith.constant 0 : i32
    %0 = arith.cmpi eq, %arg1, %c0_i32 : i32
    %1 = arith.extui %0 : i1 to i32
    %c0_i32_0 = arith.constant 0 : i32
    %2 = arith.cmpi ne, %1, %c0_i32_0 : i32
    scf.if %2 {
      %cst_10 = arith.constant 0.000000e+00 : f32
      %12 = vector.broadcast %cst_10 : f32 to vector<8x128xf32>
      %c0_11 = arith.constant 0 : index
      %c0_12 = arith.constant 0 : index
      %13 = vector.load %arg8[%c0_11, %c0_12] : memref<8x128xf32, #tpu.memory_space<vmem>>, vector<8x128xf32>
      tpu.vector_store %arg8[%c0_11, %c0_12], %12 {strides = array<i32>} : memref<8x128xf32, #tpu.memory_space<vmem>>, vector<8x128xf32>,
    } else {
    }
    %c0 = arith.constant 0 : index
    %c0_1 = arith.constant 0 : index
    %3 = vector.load %arg8[%c0, %c0_1] : memref<8x128xf32, #tpu.memory_space<vmem>>, vector<8x128xf32>
    %c0_2 = arith.constant 0 : index
    %c0_3 = arith.constant 0 : index
    %4 = vector.load %arg2[%c0_2, %c0_3] : memref<8x128xf32, #tpu.memory_space<vmem>>, vector<8x128xf32>
    %c0_4 = arith.constant 0 : index
    %c0_5 = arith.constant 0 : index
    %5 = vector.load %arg3[%c0_4, %c0_5] : memref<128x128xf32, #tpu.memory_space<vmem>>, vector<128x128xf32>
    %cst = arith.constant dense<0.000000e+00> : vector<8x128xf32>
    %6 = tpu.matmul %4, %5, %cst {dimension_numbers = #tpu.dot_dimension_numbers<[1], [0], [0], [1], [0, 0, 1, 1], [], []>} : vector<8x128xf32>, vector<128x128xf32>, vector<8x128xf32> -> vector<8x128xf32>
    %7 = arith.addf %3, %6 : vector<8x128xf32>
    %c0_6 = arith.constant 0 : index
    %c0_7 = arith.constant 0 : index
    %8 = vector.load %arg8[%c0_6, %c0_7] : memref<8x128xf32, #tpu.memory_space<vmem>>, vector<8x128xf32>
    tpu.vector_store %arg8[%c0_6, %c0_7], %7 {strides = array<i32>} : memref<8x128xf32, #tpu.memory_space<vmem>>, vector<8x128xf32>,
    %c0_i32_8 = arith.constant 0 : i32
    %9 = arith.cmpi eq, %arg1, %c0_i32_8 : i32
    %10 = arith.extui %9 : i1 to i32
    %c0_i32_9 = arith.constant 0 : i32
    %11 = arith.cmpi ne, %10, %c0_i32_9 : i32
    scf.if %11 {
      %c0_10 = arith.constant 0 : index
      %c0_11 = arith.constant 0 : index
      %12 = vector.load %arg8[%c0_10, %c0_11] : memref<8x128xf32, #tpu.memory_space<vmem>>, vector<8x128xf32>
      %cst_12 = arith.constant dense<0.000000e+00> : vector<128xf32>
      %13 = vector.multi_reduction <add>, %12, %cst_12 [0] : vector<8x128xf32> to vector<128xf32>
      %14 = vector.shape_cast %13 : vector<128xf32> to vector<1x128xf32>
      %cst_13 = arith.constant 8.000000e+00 : f32
      %15 = vector.broadcast %cst_13 : f32 to vector<1x128xf32>
      %16 = arith.divf %14, %15 : vector<1x128xf32>
      %17 = vector.broadcast %16 : vector<1x128xf32> to vector<8x128xf32>
      %18 = arith.subf %12, %17 : vector<8x128xf32>
      %19 = arith.mulf %18, %18 : vector<8x128xf32>
      %cst_14 = arith.constant dense<0.000000e+00> : vector<128xf32>
      %20 = vector.multi_reduction <add>, %19, %cst_14 [0] : vector<8x128xf32> to vector<128xf32>
      %21 = vector.shape_cast %20 : vector<128xf32> to vector<1x128xf32>
      %cst_15 = arith.constant 8.000000e+00 : f32
      %22 = vector.broadcast %cst_15 : f32 to vector<1x128xf32>
      %23 = arith.divf %21, %22 : vector<1x128xf32>
      %cst_16 = arith.constant 9.99999974E-6 : f32
      %24 = vector.broadcast %cst_16 : f32 to vector<1x128xf32>
      %25 = arith.addf %23, %24 : vector<1x128xf32>
      %26 = math.rsqrt %25 : vector<1x128xf32>
      %27 = vector.broadcast %26 : vector<1x128xf32> to vector<8x128xf32>
      %28 = arith.mulf %18, %27 : vector<8x128xf32>
      %c0_17 = arith.constant 0 : index
      %c0_18 = arith.constant 0 : index
      %29 = vector.load %arg4[%c0_17, %c0_18] : memref<1x128xf32, #tpu.memory_space<vmem>>, vector<1x128xf32>
      %30 = vector.broadcast %29 : vector<1x128xf32> to vector<8x128xf32>
      %31 = arith.mulf %30, %28 : vector<8x128xf32>
      %c0_19 = arith.constant 0 : index
      %c0_20 = arith.constant 0 : index
      %32 = vector.load %arg5[%c0_19, %c0_20] : memref<1x128xf32, #tpu.memory_space<vmem>>, vector<1x128xf32>
      %33 = vector.broadcast %32 : vector<1x128xf32> to vector<8x128xf32>
      %34 = arith.addf %31, %33 : vector<8x128xf32>
      %cst_21 = arith.constant 0.000000e+00 : f32
      %35 = vector.broadcast %cst_21 : f32 to vector<8x128xf32>
      %36 = arith.maximumf %34, %35 : vector<8x128xf32>
      %c0_22 = arith.constant 0 : index
      %c0_23 = arith.constant 0 : index
      %37 = vector.load %arg6[%c0_22, %c0_23] : memref<8x128xf32, #tpu.memory_space<vmem>>, vector<8x128xf32>
      %cst_24 = arith.constant 1.000000e-01 : f32
      %38 = vector.broadcast %cst_24 : f32 to vector<8x128xf32>
      %39 = arith.cmpf oge, %37, %38 : vector<8x128xf32>
      %cst_25 = arith.constant 1.11111116 : f32
      %40 = vector.broadcast %cst_25 : f32 to vector<8x128xf32>
      %41 = arith.mulf %36, %40 : vector<8x128xf32>
      %cst_26 = arith.constant 0.000000e+00 : f32
      %42 = vector.broadcast %cst_26 : f32 to vector<8x128xf32>
      %43 = arith.select %39, %41, %42 : vector<8x128xi1>, vector<8x128xf32>
      %c0_27 = arith.constant 0 : index
      %c0_28 = arith.constant 0 : index
      %44 = vector.load %arg7[%c0_27, %c0_28] : memref<8x128xf32, #tpu.memory_space<vmem>>, vector<8x128xf32>
      tpu.vector_store %arg7[%c0_27, %c0_28], %43 {strides = array<i32>} : memref<8x128xf32, #tpu.memory_space<vmem>>, vector<8x128xf32>,
    } else {
    }
    return
  }
  func.func @transform_0(%arg0: i32, %arg1: i32) -> (i32, i32) {
    %c0_i32 = arith.constant 0 : i32
    %c0_i32_0 = arith.constant 0 : i32
    return %c0_i32, %arg1 : i32, i32
  }
  func.func @transform_1(%arg0: i32, %arg1: i32) -> (i32, i32) {
    %c0_i32 = arith.constant 0 : i32
    return %arg1, %arg0 : i32, i32
  }
  func.func @transform_2(%arg0: i32, %arg1: i32) -> (i32, i32) {
    %c0_i32 = arith.constant 0 : i32
    %c0_i32_0 = arith.constant 0 : i32
    return %c0_i32, %arg0 : i32, i32
  }
  func.func @transform_3(%arg0: i32, %arg1: i32) -> (i32, i32) {
    %c0_i32 = arith.constant 0 : i32
    %c0_i32_0 = arith.constant 0 : i32
    return %c0_i32, %arg0 : i32, i32
  }
  func.func @transform_4(%arg0: i32, %arg1: i32) -> (i32, i32) {
    %c0_i32 = arith.constant 0 : i32
    %c0_i32_0 = arith.constant 0 : i32
    return %c0_i32, %arg0 : i32, i32
  }
  func.func @transform_5(%arg0: i32, %arg1: i32) -> (i32, i32) {
    %c0_i32 = arith.constant 0 : i32
    %c0_i32_0 = arith.constant 0 : i32
    return %c0_i32, %arg0 : i32, i32
  }
}

</mosaic_0001>

<llo_original>
// kernel: tpu_custom_call.1
$region0: #{tpu_custom_call.1}
  #allocation0 [shape = 'u32[]', space=smem, size = 0x4, offset = 0x4, fixed_abs, tag = 'smem constant byte address 0x4 - core index']
  #allocation1 [shape = 'u32[144,128]{1,0:T(1,128)}', space=vmem, size = 0x12000, scoped, tag = 'internal scratch']
  #allocation2 [shape = 'f32[8,128]{1,0:T(8,128)}', space=vmem, size = 0x1000, scoped, tag = 'scratch operand']
  %s0 = inlined_call_operand.hbm [shape: f32[8,128], index: 0, kind: input, shape index: {}]
  %s1 = inlined_call_operand.hbm [shape: f32[128,128], index: 1, kind: input, shape index: {}]
  %s2 = inlined_call_operand.vmem [shape: f32[1,128], index: 2, kind: input, shape index: {}]
  %s3 = inlined_call_operand.vmem [shape: f32[1,128], index: 3, kind: input, shape index: {}]
  %s4 = inlined_call_operand.hbm [shape: f32[8,128], index: 4, kind: input, shape index: {}]
  %s5 = inlined_call_operand.hbm [shape: f32[8,128], index: 5, kind: output, shape index: {}]
  %s6 = sld [smem:[#allocation0]]
  $region50: #{tpu_custom_call.1} parent=0
    _
  %s8 = ssub.s32 1, %s6
  %s9 = scalar_select 0, %s8, %s6
  $region1: #{tpu_custom_call.1} parent=0
    #allocation3 [shape = 'u8[4096]{0}', space=vmem, size = 0x1000, scoped, tag = 'input window, operand 0, single buffered']
    #allocation4 [shape = 's32[1]{0}', space=sflag, size = 0x4, scoped, tag = 'scoped memory for tpu_custom_call.1']
    #allocation5 [shape = 's32[1]{0}', space=sflag, size = 0x4, scoped, tag = 'scoped memory for tpu_custom_call.1']
    #allocation6 [shape = 'u8[65536]{0}', space=vmem, size = 0x10000, scoped, tag = 'input window, operand 1, single buffered']
    #allocation7 [shape = 's32[1]{0}', space=sflag, size = 0x4, scoped, tag = 'scoped memory for tpu_custom_call.1']
    #allocation8 [shape = 'u8[4096]{0}', space=vmem, size = 0x1000, scoped, tag = 'input window, operand 4, single buffered']
    #allocation9 [shape = 'u8[4096]{0}', space=vmem, size = 0x1000, scoped, tag = 'output window, operand 0, single buffered']
    %10 = vsyncpa [#allocation4], 0
    %11 = vsyncpa [#allocation7], 0
    %12 = vsyncpa [#allocation5], 0
    // Predicated region
    $region2: #{tpu_custom_call.1} parent=1 // pred_check
      _
    $region3: #{tpu_custom_call.1} parent=1 // pred_check_branch
      %14 = sbr.rel (0) target = $region5
    $region4: #{tpu_custom_call.1} parent=1 // pred_region
      %s16 = ssub.s32 128, 128
      %17 = vsyncadd [#allocation4], %s16
      %s19 = sshll.u32 [#allocation3], 4
      %s20 = int_to_ptr.vmem [resolvable:$true] %s19
      %22 = dma.hbm_to_vmem [thread:$0]  %s0, 128, %s20, [#allocation4]
    $region5: #{tpu_custom_call.1} parent=1 // pred_fallthru
      _
    // Predicated region
    $region6: #{tpu_custom_call.1} parent=1 // pred_check
      _
    $region7: #{tpu_custom_call.1} parent=1 // pred_check_branch
      %24 = sbr.rel (0) target = $region9
    $region8: #{tpu_custom_call.1} parent=1 // pred_region
      %s26 = ssub.s32 2048, 2048
      %27 = vsyncadd [#allocation7], %s26
      %s28 = sshll.u32 [#allocation6], 4
      %s29 = int_to_ptr.vmem [resolvable:$true] %s28
      %34 = dma.hbm_to_vmem [thread:$0]  %s1, 2048, %s29, [#allocation7], 128, 128, 8
    $region9: #{tpu_custom_call.1} parent=1 // pred_fallthru
      _
    // Predicated region
    $region10: #{tpu_custom_call.1} parent=1 // pred_check
      _
    $region11: #{tpu_custom_call.1} parent=1 // pred_check_branch
      %36 = sbr.rel (0) target = $region13
    $region12: #{tpu_custom_call.1} parent=1 // pred_region
      _
    $region13: #{tpu_custom_call.1} parent=1 // pred_fallthru
      _
    // Predicated region
    $region14: #{tpu_custom_call.1} parent=1 // pred_check
      _
    $region15: #{tpu_custom_call.1} parent=1 // pred_check_branch
      %38 = sbr.rel (0) target = $region17
    $region16: #{tpu_custom_call.1} parent=1 // pred_region
      _
    $region17: #{tpu_custom_call.1} parent=1 // pred_fallthru
      _
    // Predicated region
    $region18: #{tpu_custom_call.1} parent=1 // pred_check
      _
    $region19: #{tpu_custom_call.1} parent=1 // pred_check_branch
      %40 = sbr.rel (0) target = $region21
    $region20: #{tpu_custom_call.1} parent=1 // pred_region
      %s42 = ssub.s32 128, 128
      %43 = vsyncadd [#allocation7], %s42
      %s45 = sshll.u32 [#allocation8], 4
      %s46 = int_to_ptr.vmem [resolvable:$true] %s45
      %48 = dma.hbm_to_vmem [thread:$0]  %s4, 128, %s46, [#allocation7]
    $region21: #{tpu_custom_call.1} parent=1 // pred_fallthru
      _
    // Predicated region
    $region22: #{tpu_custom_call.1} parent=1 // pred_check
      _
    $region23: #{tpu_custom_call.1} parent=1 // pred_check_branch
      %50 = sbr.rel (0) target = $region25
    $region24: #{tpu_custom_call.1} parent=1 // pred_region
      %51 = dma.done [#allocation4], 128
    $region25: #{tpu_custom_call.1} parent=1 // pred_fallthru
      _
    // Predicated region
    $region26: #{tpu_custom_call.1} parent=1 // pred_check
      _
    $region27: #{tpu_custom_call.1} parent=1 // pred_check_branch
      %53 = sbr.rel (0) target = $region29
    $region28: #{tpu_custom_call.1} parent=1 // pred_region
      %54 = dma.done [#allocation7], 2048
    $region29: #{tpu_custom_call.1} parent=1 // pred_fallthru
      _
    // Predicated region
    $region30: #{tpu_custom_call.1} parent=1 // pred_check
      _
    $region31: #{tpu_custom_call.1} parent=1 // pred_check_branch
      %56 = sbr.rel (0) target = $region33
    $region32: #{tpu_custom_call.1} parent=1 // pred_region
      %57 = dma.done [#allocation7], 128
    $region33: #{tpu_custom_call.1} parent=1 // pred_fallthru
      _
    %p58 = scmp.eq.s32.totalorder 0, 0
    // Predicated region
    $region34: #{tpu_custom_call.1} parent=1 // pred_check
      %p59 = pneg %p58
    $region35: #{tpu_custom_call.1} parent=1 // pred_check_branch
      %61 = sbr.rel (%p59) target = $region37
    $region36: #{tpu_custom_call.1} parent=1 // pred_region
      %62 = vst [vmem:[#allocation2] sm:$0xff] 0.0
    $region37: #{tpu_custom_call.1} parent=1 // pred_fallthru
      _
    %v63 = vld [vmem:[#allocation2] sm:$0xff]
    %v64 = vld [vmem:[#allocation3] sm:$0xff]
    %v65 = vld [vmem:[#allocation6] sm:$0xff]
    %v66 = vld [vmem:[#allocation6 + $0x8] sm:$0xff]
    %v67 = vld [vmem:[#allocation6 + $0x10] sm:$0xff]
    %v68 = vld [vmem:[#allocation6 + $0x18] sm:$0xff]
    %v69 = vld [vmem:[#allocation6 + $0x20] sm:$0xff]
    %v70 = vld [vmem:[#allocation6 + $0x28] sm:$0xff]
    %v71 = vld [vmem:[#allocation6 + $0x30] sm:$0xff]
    %v72 = vld [vmem:[#allocation6 + $0x38] sm:$0xff]
    %v73 = vld [vmem:[#allocation6 + $0x40] sm:$0xff]
    %v74 = vld [vmem:[#allocation6 + $0x48] sm:$0xff]
    %v75 = vld [vmem:[#allocation6 + $0x50] sm:$0xff]
    %v76 = vld [vmem:[#allocation6 + $0x58] sm:$0xff]
    %v77 = vld [vmem:[#allocation6 + $0x60] sm:$0xff]
    %v78 = vld [vmem:[#allocation6 + $0x68] sm:$0xff]
    %v79 = vld [vmem:[#allocation6 + $0x70] sm:$0xff]
    %v80 = vld [vmem:[#allocation6 + $0x78] sm:$0xff]
    %81 = vmatprep.subr.mxu0 0.0
    %82 = vmatpush1.msra.mxu0 %v80
    %83 = vmatprep.subr.mxu0 0.0
    %84 = vmatpush1.msra.mxu0 %v79
    %85 = vmatprep.subr.mxu0 0.0
    %86 = vmatpush1.msra.mxu0 %v78
    %87 = vmatprep.subr.mxu0 0.0
    %88 = vmatpush1.msra.mxu0 %v77
    %89 = vmatprep.subr.mxu0 0.0
    %90 = vmatpush1.msra.mxu0 %v76
    %91 = vmatprep.subr.mxu0 0.0
    %92 = vmatpush1.msra.mxu0 %v75
    %93 = vmatprep.subr.mxu0 0.0
    %94 = vmatpush1.msra.mxu0 %v74
    %95 = vmatprep.subr.mxu0 0.0
    %96 = vmatpush1.msra.mxu0 %v73
    %97 = vmatprep.subr.mxu0 0.0
    %98 = vmatpush1.msra.mxu0 %v72
    %99 = vmatprep.subr.mxu0 0.0
    %100 = vmatpush1.msra.mxu0 %v71
    %101 = vmatprep.subr.mxu0 0.0
    %102 = vmatpush1.msra.mxu0 %v70
    %103 = vmatprep.subr.mxu0 0.0
    %104 = vmatpush1.msra.mxu0 %v69
    %105 = vmatprep.subr.mxu0 0.0
    %106 = vmatpush1.msra.mxu0 %v68
    %107 = vmatprep.subr.mxu0 0.0
    %108 = vmatpush1.msra.mxu0 %v67
    %109 = vmatprep.subr.mxu0 0.0
    %110 = vmatpush1.msra.mxu0 %v66
    %111 = vmatprep.subr.mxu0 0.0
    %112 = vmatpush1.msra.mxu0 %v65
    %113 = vmatprep.subr.mxu0 0.0
    %114 = vmatpush2.msra.mxu0 0.0
    %115 = vmatprep.subr.mxu0 0.0
    %116 = vmatpush2.msra.mxu0 0.0
    %117 = vmatprep.subr.mxu0 0.0
    %118 = vmatpush2.msra.mxu0 0.0
    %119 = vmatprep.subr.mxu0 0.0
    %120 = vmatpush2.msra.mxu0 0.0
    %121 = vmatprep.subr.mxu0 0.0
    %122 = vmatpush2.msra.mxu0 0.0
    %123 = vmatprep.subr.mxu0 0.0
    %124 = vmatpush2.msra.mxu0 0.0
    %125 = vmatprep.subr.mxu0 0.0
    %126 = vmatpush2.msra.mxu0 0.0
    %127 = vmatprep.subr.mxu0 0.0
    %128 = vmatpush2.msra.mxu0 0.0
    %129 = vmatprep.subr.mxu0 0.0
    %130 = vmatpush2.msra.mxu0 0.0
    %131 = vmatprep.subr.mxu0 0.0
    %132 = vmatpush2.msra.mxu0 0.0
    %133 = vmatprep.subr.mxu0 0.0
    %134 = vmatpush2.msra.mxu0 0.0
    %135 = vmatprep.subr.mxu0 0.0
    %136 = vmatpush2.msra.mxu0 0.0
    %137 = vmatprep.subr.mxu0 0.0
    %138 = vmatpush2.msra.mxu0 0.0
    %139 = vmatprep.subr.mxu0 0.0
    %140 = vmatpush2.msra.mxu0 0.0
    %141 = vmatprep.subr.mxu0 0.0
    %142 = vmatpush2.msra.mxu0 0.0
    %143 = vmatprep.subr.mxu0 0.0
    %144 = vmatpush2.msra.mxu0 0.0
    %145 = vmatprep.mubr.f32.mxu0 0.0
    %146 = vmatmul.mubr.f32.gmra.mxu0 %v64
    %v147 = vpop.f32.mrf.mxu0
    %v148 = vadd.f32 0.0, %v147
    %v149 = vpop.f32.mrf.mxu0
    %150 = vdwg.mxu0
    %v151 = vadd.f32 %v63, %v148
    %152 = vst [vmem:[#allocation2] sm:$0xff] %v151
    // Predicated region
    $region38: #{tpu_custom_call.1} parent=1 // pred_check
      %p153 = pneg %p58
    $region39: #{tpu_custom_call.1} parent=1 // pred_check_branch
      %155 = sbr.rel (%p153) target = $region41
    $region40: #{tpu_custom_call.1} parent=1 // pred_region
      %v156 = vld [vmem:[#allocation2] sm:$0xff]
      %v157 = vrot.slane %v156, 4
      %v158 = vadd.f32 %v156, %v157
      %v159 = vrot.slane %v158, 2
      %v160 = vadd.f32 %v158, %v159
      %v161 = vrot.slane %v160, 1
      %v162 = vadd.f32 %v160, %v161
      %v163 = vrcp.pop 8.0
      %v164 = vmul.f32 %v162, %v163
      %v165 = vsub.f32 %v156, %v164
      %v166 = vmul.f32 %v165, %v165
      %v167 = vrot.slane %v166, 4
      %v168 = vadd.f32 %v166, %v167
      %v169 = vrot.slane %v168, 2
      %v170 = vadd.f32 %v168, %v169
      %v171 = vrot.slane %v170, 1
      %v172 = vadd.f32 %v170, %v171
      %v173 = vmul.f32 %v172, %v163
      %v174 = vadd.f32 %v173, 1e-05
      %v175 = vrsqrt.pop %v174
      %v176 = vmul.f32 %v165, %v175
      %v177 = vld [vmem:[%s2] sm:$0x1]
      %v179 = vlaneseq
      %v180 = vshrl.u32 %v179, 7
      %v181 = vsub.s32 0, %v180
      %v182 = vrot.slane %v177, %v181
      %v184 = vmul.f32 %v182, %v176
      %v185 = vld [vmem:[%s3] sm:$0x1]
      %v187 = vlaneseq
      %v188 = vshrl.u32 %v187, 7
      %v189 = vsub.s32 0, %v188
      %v190 = vrot.slane %v185, %v189
      %v192 = vadd.f32 %v184, %v190
      %v193 = vmax.f32 %v192, 0.0
      %v194 = vld [vmem:[#allocation8] sm:$0xff]
      %vm195 = vcmp.ge.f32.partialorder %v194, 0.1
      %v196 = vmul.f32 %v193, 1.1111112
      %v197 = vsel %vm195, %v196, 0.0
      %198 = vst [vmem:[#allocation9] sm:$0xff] %v197
    $region41: #{tpu_custom_call.1} parent=1 // pred_fallthru
      _
    // Predicated region
    $region42: #{tpu_custom_call.1} parent=1 // pred_check
      _
    $region43: #{tpu_custom_call.1} parent=1 // pred_check_branch
      %200 = sbr.rel (0) target = $region45
    $region44: #{tpu_custom_call.1} parent=1 // pred_region
      %s202 = ssub.s32 128, 128
      %203 = vsyncadd [#allocation5], %s202
      %s205 = sshll.u32 [#allocation9], 4
      %s206 = int_to_ptr.vmem [resolvable:$true] %s205
      %208 = dma.vmem_to_hbm [thread:$0]  %s206, 128, %s5, [#allocation5]
    $region45: #{tpu_custom_call.1} parent=1 // pred_fallthru
      _
    // Predicated region
    $region46: #{tpu_custom_call.1} parent=1 // pred_check
      _
    $region47: #{tpu_custom_call.1} parent=1 // pred_check_branch
      %210 = sbr.rel (0) target = $region49
    $region48: #{tpu_custom_call.1} parent=1 // pred_region
      %211 = dma.done [#allocation5], 128
    $region49: #{tpu_custom_call.1} parent=1 // pred_fallthru
      _
    %212 = vsyncpa [#allocation4], 1
    %213 = vsyncpa [#allocation7], 1
    %214 = vsyncpa [#allocation5], 1

</llo_original>
